<compile_context>
chip_gen: v5e
topology: v5e:2x2
jax: 0.10.0
libtpu: 0.0.40
codegen_flags: <defaults>
</compile_context>

<pallas_src>
import math

import jax
import jax.numpy as jnp
from jax.experimental import pallas as pl
from jax.experimental.pallas import tpu as pltpu

_LOG2E = 1.4426950408889634
_NEG_CLAMP = -1e30   # finite floor for the running max (guards fully -inf-masked rows)


def _flash_attn_kernel(q_ref, k_ref, v_ref, m_ref, o_ref, qs_sc, m_sc, l_sc, acc_sc):
    ki = pl.program_id(3)

    d = q_ref.shape[-1]
    # exp2 trick: fold log2(e) into the Q pre-scale (and into the bias below) so the online
    # softmax uses jnp.exp2 directly (no hidden x*log2e VPU multiply inside jnp.exp).
    scale2 = _LOG2E / math.sqrt(d)

    @pl.when(ki == 0)
    def _init():
        # Q block is resident across the kv axis -> scale / cast it exactly once per (b, h, qi).
        qs_sc[...] = (q_ref[0] * scale2).astype(qs_sc.dtype)
        m_sc[...] = jnp.full_like(m_sc, -jnp.inf)
        l_sc[...] = jnp.zeros_like(l_sc)
        acc_sc[...] = jnp.zeros_like(acc_sc)

    q = qs_sc[...]                # (Hblk, tq, D), pre-scaled by log2(e)/sqrt(D)
    k = k_ref[0]                  # (Hblk, tk, D)
    v = v_ref[0]                  # (Hblk, tk, D)
    # additive mask tile (shared by all heads in the block), moved to the log2 domain
    bias = m_ref[0, 0].astype(jnp.float32) * _LOG2E    # (tq, tk)

    # scores (log2 domain): batched over heads, contracting D (no materialized K^T -> no XLU xpose)
    s = jax.lax.dot_general(
        q, k,
        dimension_numbers=(((2,), (2,)), ((0,), (0,))),
        preferred_element_type=jnp.float32,
    ) + bias[None]                # (Hblk, tq, tk), f32

    # online softmax (base 2): p = 2^(s - m_new), alpha = 2^(m_prev - m_new)
    m_prev = m_sc[...]
    m_new = jnp.maximum(m_prev, jnp.max(s, axis=-1, keepdims=True))
    m_new = jnp.maximum(m_new, _NEG_CLAMP)   # keep finite even if the whole row is -inf masked
    alpha = jnp.exp2(m_prev - m_new)
    p = jnp.exp2(s - m_new)

    l_sc[...] = alpha * l_sc[...] + jnp.sum(p, axis=-1, keepdims=True)
    pv = jax.lax.dot_general(
        p.astype(v.dtype), v,
        dimension_numbers=(((2,), (1,)), ((0,), (0,))),
        preferred_element_type=jnp.float32,
    )                             # (Hblk, tq, D)
    acc_sc[...] = alpha * acc_sc[...] + pv
    m_sc[...] = m_new

    @pl.when(ki == pl.num_programs(3) - 1)
    def _finalize():
        denom = l_sc[...]
        inv = pl.reciprocal(denom, approx=True)   # EUP slot (cheap)
        inv = inv * (2.0 - denom * inv)           # one Newton step -> ~f32-accurate
        o_ref[0] = (acc_sc[...] * inv).astype(o_ref.dtype)


def _pick_head_block(h, pref=8):
    b = min(h, pref)
    while h % b:
        b -= 1
    return b


def _pick_q_block(s, pref):
    # tq sits in a second-to-last block dim: needs % 8 == 0 or == full extent.
    if s <= pref:
        return s
    b = (pref // 8) * 8
    while b >= 8:
        if s % b == 0:
            return b
        b -= 8
    return s


def _pick_kv_block(s, pref):
    # tk is the mask block's last dim: needs % 128 == 0 or == full extent.
    if s <= pref:
        return s
    b = (pref // 128) * 128
    while b >= 128:
        if s % b == 0:
            return b
        b -= 128
    return s


def _tile_config():
    """Generation-aware tile preferences + scoped-VMEM budget.

    v5e/v6e have 128 MiB VMEM per TC -> take tq=512 and raise the scoped limit to 96 MiB.
    v7x has only 64 MiB per TC (and the f32 score/prob intermediates are the big consumers),
    so cap at tq=256, tk=512 with a ~48 MiB limit.  Unknown/undetectable -> v7x-safe config.
    """
    try:
        cap = pltpu.get_tpu_info().vmem_capacity_bytes
    except Exception:
        cap = None
    if cap is not None and cap >= 100 * 1024 * 1024:      # v5e / v6e class
        return 512, 512, 96 * 1024 * 1024
    return 256, 512, 48 * 1024 * 1024                      # v7x or unknown


def attention(Q2, K, V, mask):
    B, H, S, D = Q2.shape
    assert K.shape == (B, H, S, D) and V.shape == (B, H, S, D)
    assert mask.shape == (B, 1, S, S)

    tq_pref, tk_pref, vmem_limit = _tile_config()
    Hblk = _pick_head_block(H)
    tq = _pick_q_block(S, tq_pref)
    tk = _pick_kv_block(S, tk_pref)

    grid = (B, H // Hblk, S // tq, S // tk)

    q_spec = pl.BlockSpec((1, Hblk, tq, D), lambda b, h, qi, ki: (b, h, qi, 0))
    kv_spec = pl.BlockSpec((1, Hblk, tk, D), lambda b, h, qi, ki: (b, h, ki, 0))
    m_spec = pl.BlockSpec((1, 1, tq, tk), lambda b, h, qi, ki: (b, 0, qi, ki))
    # same output block across the kv axis -> resident accumulator (kv axis is "arbitrary")
    o_spec = pl.BlockSpec((1, Hblk, tq, D), lambda b, h, qi, ki: (b, h, qi, 0))

    return pl.pallas_call(
        _flash_attn_kernel,
        out_shape=jax.ShapeDtypeStruct((B, H, S, D), Q2.dtype),
        grid_spec=pltpu.PrefetchScalarGridSpec(
            num_scalar_prefetch=0,
            grid=grid,
            in_specs=[q_spec, kv_spec, kv_spec, m_spec],
            out_specs=o_spec,
            scratch_shapes=[
                pltpu.VMEM((Hblk, tq, D), Q2.dtype),      # pre-scaled Q (hoisted out of kv loop)
                pltpu.VMEM((Hblk, tq, 1), jnp.float32),   # running max (log2 domain)
                pltpu.VMEM((Hblk, tq, 1), jnp.float32),   # running denom
                pltpu.VMEM((Hblk, tq, D), jnp.float32),   # output accumulator
            ],
        ),
        compiler_params=pltpu.CompilerParams(
            dimension_semantics=("parallel", "parallel", "parallel", "arbitrary"),
            vmem_limit_bytes=vmem_limit,
        ),
    )(Q2, K, V, mask)


def attention_ref(Q2, K, V, mask):
    d = Q2.shape[-1]
    qk = jnp.einsum("bhsd,bhtd->bhst", Q2, K) / math.sqrt(d)
    qk = qk + mask
    w = jax.nn.softmax(qk, axis=-1)
    return jnp.einsum("bhst,bhtd->bhsd", w, V)


if __name__ == "__main__":
    B, H, S, D = 2, 4, 16, 32
    key = jax.random.PRNGKey(0)
    kq, kk, kv = jax.random.split(key, 3)

    Q2 = jax.random.normal(kq, (B, H, S, D), dtype=jnp.float32)
    K = jax.random.normal(kk, (B, H, S, D), dtype=jnp.float32)
    V = jax.random.normal(kv, (B, H, S, D), dtype=jnp.float32)

    # deterministic causal additive mask, broadcast over heads
    causal = jnp.tril(jnp.ones((S, S), dtype=jnp.float32))
    mask = jnp.where(causal == 1.0, 0.0, -1e9)
    mask = jnp.broadcast_to(mask[None, None], (B, 1, S, S))

    out = attention(Q2, K, V, mask)
    jax.block_until_ready(out)

    ref = attention_ref(Q2, K, V, mask)
    assert out.shape == (B, H, S, D)
    assert jnp.allclose(out, ref, atol=2e-5, rtol=2e-5), "mismatch vs reference"

    print("KERNEL_OK")
</pallas_src>

<mosaic_0001>
module attributes {stable_mosaic.version = 11 : i64} {
  func.func @_flash_attn_kernel(%arg0: i32, %arg1: i32, %arg2: i32, %arg3: i32, %arg4: memref<1x4x16x32xf32, #tpu.memory_space<vmem>>, %arg5: memref<1x4x16x32xf32, #tpu.memory_space<vmem>>, %arg6: memref<1x4x16x32xf32, #tpu.memory_space<vmem>>, %arg7: memref<1x1x16x16xf32, #tpu.memory_space<vmem>>, %arg8: memref<1x4x16x32xf32, #tpu.memory_space<vmem>>, %arg9: memref<4x16x32xf32, #tpu.memory_space<vmem>>, %arg10: memref<4x16x1xf32, #tpu.memory_space<vmem>>, %arg11: memref<4x16x1xf32, #tpu.memory_space<vmem>>, %arg12: memref<4x16x32xf32, #tpu.memory_space<vmem>>) attributes {dimension_semantics = [#tpu.dimension_semantics<parallel>, #tpu.dimension_semantics<parallel>, #tpu.dimension_semantics<parallel>, #tpu.dimension_semantics<arbitrary>], iteration_bounds = array<i64: 2, 1, 1, 1>, scalar_prefetch = 0 : i64, scratch_operands = 4 : i64, tpu.core_type = #tpu.core_type<tc>, window_params = [{transform_indices = @transform_0, window_bounds = array<i64: 1, 4, 16, 32>}, {transform_indices = @transform_1, window_bounds = array<i64: 1, 4, 16, 32>}, {transform_indices = @transform_2, window_bounds = array<i64: 1, 4, 16, 32>}, {transform_indices = @transform_3, window_bounds = array<i64: 1, 1, 16, 16>}, {transform_indices = @transform_4, window_bounds = array<i64: 1, 4, 16, 32>}]} {
    %c0_i32 = arith.constant 0 : i32
    %0 = arith.cmpi eq, %arg3, %c0_i32 : i32
    %1 = arith.extui %0 : i1 to i32
    %c0_i32_0 = arith.constant 0 : i32
    %2 = arith.cmpi ne, %1, %c0_i32_0 : i32
    scf.if %2 {
      %c0_40 = arith.constant 0 : index
      %c0_41 = arith.constant 0 : index
      %c0_42 = arith.constant 0 : index
      %c0_43 = arith.constant 0 : index
      %43 = vector.load %arg4[%c0_40, %c0_41, %c0_42, %c0_43] : memref<1x4x16x32xf32, #tpu.memory_space<vmem>>, vector<1x4x16x32xf32>
      %44 = vector.shape_cast %43 : vector<1x4x16x32xf32> to vector<4x16x32xf32>
      %cst_44 = arith.constant 0.255034864 : f32
      %45 = vector.broadcast %cst_44 : f32 to vector<4x16x32xf32>
      %46 = arith.mulf %44, %45 : vector<4x16x32xf32>
      %c0_45 = arith.constant 0 : index
      %c0_46 = arith.constant 0 : index
      %c0_47 = arith.constant 0 : index
      %47 = vector.load %arg9[%c0_45, %c0_46, %c0_47] : memref<4x16x32xf32, #tpu.memory_space<vmem>>, vector<4x16x32xf32>
      tpu.vector_store %arg9[%c0_45, %c0_46, %c0_47], %46 {strides = array<i32>} : memref<4x16x32xf32, #tpu.memory_space<vmem>>, vector<4x16x32xf32>,
      %cst_48 = arith.constant 0xFF800000 : f32
      %48 = vector.broadcast %cst_48 : f32 to vector<4x16x1xf32>
      %c0_49 = arith.constant 0 : index
      %c0_50 = arith.constant 0 : index
      %c0_51 = arith.constant 0 : index
      %49 = vector.load %arg10[%c0_49, %c0_50, %c0_51] : memref<4x16x1xf32, #tpu.memory_space<vmem>>, vector<4x16x1xf32>
      tpu.vector_store %arg10[%c0_49, %c0_50, %c0_51], %48 {strides = array<i32>} : memref<4x16x1xf32, #tpu.memory_space<vmem>>, vector<4x16x1xf32>,
      %cst_52 = arith.constant 0.000000e+00 : f32
      %50 = vector.broadcast %cst_52 : f32 to vector<4x16x1xf32>
      %c0_53 = arith.constant 0 : index
      %c0_54 = arith.constant 0 : index
      %c0_55 = arith.constant 0 : index
      %51 = vector.load %arg11[%c0_53, %c0_54, %c0_55] : memref<4x16x1xf32, #tpu.memory_space<vmem>>, vector<4x16x1xf32>
      tpu.vector_store %arg11[%c0_53, %c0_54, %c0_55], %50 {strides = array<i32>} : memref<4x16x1xf32, #tpu.memory_space<vmem>>, vector<4x16x1xf32>,
      %cst_56 = arith.constant 0.000000e+00 : f32
      %52 = vector.broadcast %cst_56 : f32 to vector<4x16x32xf32>
      %c0_57 = arith.constant 0 : index
      %c0_58 = arith.constant 0 : index
      %c0_59 = arith.constant 0 : index
      %53 = vector.load %arg12[%c0_57, %c0_58, %c0_59] : memref<4x16x32xf32, #tpu.memory_space<vmem>>, vector<4x16x32xf32>
      tpu.vector_store %arg12[%c0_57, %c0_58, %c0_59], %52 {strides = array<i32>} : memref<4x16x32xf32, #tpu.memory_space<vmem>>, vector<4x16x32xf32>,
    } else {
    }
    %c0 = arith.constant 0 : index
    %c0_1 = arith.constant 0 : index
    %c0_2 = arith.constant 0 : index
    %3 = vector.load %arg9[%c0, %c0_1, %c0_2] : memref<4x16x32xf32, #tpu.memory_space<vmem>>, vector<4x16x32xf32>
    %c0_3 = arith.constant 0 : index
    %c0_4 = arith.constant 0 : index
    %c0_5 = arith.constant 0 : index
    %c0_6 = arith.constant 0 : index
    %4 = vector.load %arg5[%c0_3, %c0_4, %c0_5, %c0_6] : memref<1x4x16x32xf32, #tpu.memory_space<vmem>>, vector<1x4x16x32xf32>
    %5 = vector.shape_cast %4 : vector<1x4x16x32xf32> to vector<4x16x32xf32>
    %c0_7 = arith.constant 0 : index
    %c0_8 = arith.constant 0 : index
    %c0_9 = arith.constant 0 : index
    %c0_10 = arith.constant 0 : index
    %6 = vector.load %arg6[%c0_7, %c0_8, %c0_9, %c0_10] : memref<1x4x16x32xf32, #tpu.memory_space<vmem>>, vector<1x4x16x32xf32>
    %7 = vector.shape_cast %6 : vector<1x4x16x32xf32> to vector<4x16x32xf32>
    %c0_11 = arith.constant 0 : index
    %c0_12 = arith.constant 0 : index
    %c0_13 = arith.constant 0 : index
    %c0_14 = arith.constant 0 : index
    %8 = vector.load %arg7[%c0_11, %c0_12, %c0_13, %c0_14] : memref<1x1x16x16xf32, #tpu.memory_space<vmem>>, vector<1x1x16x16xf32>
    %9 = vector.shape_cast %8 : vector<1x1x16x16xf32> to vector<16x16xf32>
    %cst = arith.constant 1.44269502 : f32
    %10 = vector.broadcast %cst : f32 to vector<16x16xf32>
    %11 = arith.mulf %9, %10 : vector<16x16xf32>
    %cst_15 = arith.constant dense<0.000000e+00> : vector<4x16x16xf32>
    %12 = tpu.matmul %3, %5, %cst_15 {dimension_numbers = #tpu.dot_dimension_numbers<[2], [2], [1], [1], [0, 0, 0, 1, 1, 1], [0], [0]>} : vector<4x16x32xf32>, vector<4x16x32xf32>, vector<4x16x16xf32> -> vector<4x16x16xf32>
    %13 = vector.shape_cast %11 : vector<16x16xf32> to vector<1x16x16xf32>
    %14 = vector.broadcast %13 : vector<1x16x16xf32> to vector<4x16x16xf32>
    %15 = arith.addf %12, %14 : vector<4x16x16xf32>
    %c0_16 = arith.constant 0 : index
    %c0_17 = arith.constant 0 : index
    %c0_18 = arith.constant 0 : index
    %16 = vector.load %arg10[%c0_16, %c0_17, %c0_18] : memref<4x16x1xf32, #tpu.memory_space<vmem>>, vector<4x16x1xf32>
    %cst_19 = arith.constant dense<0xFF800000> : vector<4x16xf32>
    %17 = vector.multi_reduction <maximumf>, %15, %cst_19 [2] : vector<4x16x16xf32> to vector<4x16xf32>
    %18 = vector.shape_cast %17 : vector<4x16xf32> to vector<4x16x1xf32>
    %19 = arith.maximumf %16, %18 : vector<4x16x1xf32>
    %cst_20 = arith.constant -1.000000e+30 : f32
    %20 = vector.broadcast %cst_20 : f32 to vector<4x16x1xf32>
    %21 = arith.maximumf %19, %20 : vector<4x16x1xf32>
    %22 = arith.subf %16, %21 : vector<4x16x1xf32>
    %23 = math.exp2 %22 : vector<4x16x1xf32>
    %24 = vector.broadcast %21 : vector<4x16x1xf32> to vector<4x16x16xf32>
    %25 = arith.subf %15, %24 : vector<4x16x16xf32>
    %26 = math.exp2 %25 : vector<4x16x16xf32>
    %c0_21 = arith.constant 0 : index
    %c0_22 = arith.constant 0 : index
    %c0_23 = arith.constant 0 : index
    %27 = vector.load %arg11[%c0_21, %c0_22, %c0_23] : memref<4x16x1xf32, #tpu.memory_space<vmem>>, vector<4x16x1xf32>
    %28 = arith.mulf %23, %27 : vector<4x16x1xf32>
    %cst_24 = arith.constant dense<0.000000e+00> : vector<4x16xf32>
    %29 = vector.multi_reduction <add>, %26, %cst_24 [2] : vector<4x16x16xf32> to vector<4x16xf32>
    %30 = vector.shape_cast %29 : vector<4x16xf32> to vector<4x16x1xf32>
    %31 = arith.addf %28, %30 : vector<4x16x1xf32>
    %c0_25 = arith.constant 0 : index
    %c0_26 = arith.constant 0 : index
    %c0_27 = arith.constant 0 : index
    %32 = vector.load %arg11[%c0_25, %c0_26, %c0_27] : memref<4x16x1xf32, #tpu.memory_space<vmem>>, vector<4x16x1xf32>
    tpu.vector_store %arg11[%c0_25, %c0_26, %c0_27], %31 {strides = array<i32>} : memref<4x16x1xf32, #tpu.memory_space<vmem>>, vector<4x16x1xf32>,
    %cst_28 = arith.constant dense<0.000000e+00> : vector<4x16x32xf32>
    %33 = tpu.matmul %26, %7, %cst_28 {dimension_numbers = #tpu.dot_dimension_numbers<[2], [1], [1], [2], [0, 0, 0, 1, 1, 2], [0], [0]>} : vector<4x16x16xf32>, vector<4x16x32xf32>, vector<4x16x32xf32> -> vector<4x16x32xf32>
    %c0_29 = arith.constant 0 : index
    %c0_30 = arith.constant 0 : index
    %c0_31 = arith.constant 0 : index
    %34 = vector.load %arg12[%c0_29, %c0_30, %c0_31] : memref<4x16x32xf32, #tpu.memory_space<vmem>>, vector<4x16x32xf32>
    %35 = vector.broadcast %23 : vector<4x16x1xf32> to vector<4x16x32xf32>
    %36 = arith.mulf %35, %34 : vector<4x16x32xf32>
    %37 = arith.addf %36, %33 : vector<4x16x32xf32>
    %c0_32 = arith.constant 0 : index
    %c0_33 = arith.constant 0 : index
    %c0_34 = arith.constant 0 : index
    %38 = vector.load %arg12[%c0_32, %c0_33, %c0_34] : memref<4x16x32xf32, #tpu.memory_space<vmem>>, vector<4x16x32xf32>
    tpu.vector_store %arg12[%c0_32, %c0_33, %c0_34], %37 {strides = array<i32>} : memref<4x16x32xf32, #tpu.memory_space<vmem>>, vector<4x16x32xf32>,
    %c0_35 = arith.constant 0 : index
    %c0_36 = arith.constant 0 : index
    %c0_37 = arith.constant 0 : index
    %39 = vector.load %arg10[%c0_35, %c0_36, %c0_37] : memref<4x16x1xf32, #tpu.memory_space<vmem>>, vector<4x16x1xf32>
    tpu.vector_store %arg10[%c0_35, %c0_36, %c0_37], %21 {strides = array<i32>} : memref<4x16x1xf32, #tpu.memory_space<vmem>>, vector<4x16x1xf32>,
    %c0_i32_38 = arith.constant 0 : i32
    %40 = arith.cmpi eq, %arg3, %c0_i32_38 : i32
    %41 = arith.extui %40 : i1 to i32
    %c0_i32_39 = arith.constant 0 : i32
    %42 = arith.cmpi ne, %41, %c0_i32_39 : i32
    scf.if %42 {
      %c0_40 = arith.constant 0 : index
      %c0_41 = arith.constant 0 : index
      %c0_42 = arith.constant 0 : index
      %43 = vector.load %arg11[%c0_40, %c0_41, %c0_42] : memref<4x16x1xf32, #tpu.memory_space<vmem>>, vector<4x16x1xf32>
      %44 = tpu.reciprocal %43 {approx = true} : vector<4x16x1xf32> -> vector<4x16x1xf32>
      %45 = arith.mulf %43, %44 : vector<4x16x1xf32>
      %cst_43 = arith.constant 2.000000e+00 : f32
      %46 = vector.broadcast %cst_43 : f32 to vector<4x16x1xf32>
      %47 = arith.subf %46, %45 : vector<4x16x1xf32>
      %48 = arith.mulf %44, %47 : vector<4x16x1xf32>
      %c0_44 = arith.constant 0 : index
      %c0_45 = arith.constant 0 : index
      %c0_46 = arith.constant 0 : index
      %49 = vector.load %arg12[%c0_44, %c0_45, %c0_46] : memref<4x16x32xf32, #tpu.memory_space<vmem>>, vector<4x16x32xf32>
      %50 = vector.broadcast %48 : vector<4x16x1xf32> to vector<4x16x32xf32>
      %51 = arith.mulf %49, %50 : vector<4x16x32xf32>
      %c0_47 = arith.constant 0 : index
      %c0_48 = arith.constant 0 : index
      %c0_49 = arith.constant 0 : index
      %c0_50 = arith.constant 0 : index
      %52 = vector.load %arg8[%c0_47, %c0_48, %c0_49, %c0_50] : memref<1x4x16x32xf32, #tpu.memory_space<vmem>>, vector<1x4x16x32xf32>
      %53 = vector.shape_cast %52 : vector<1x4x16x32xf32> to vector<4x16x32xf32>
      %54 = vector.shape_cast %51 : vector<4x16x32xf32> to vector<1x4x16x32xf32>
      tpu.vector_store %arg8[%c0_47, %c0_48, %c0_49, %c0_50], %54 {strides = array<i32>} : memref<1x4x16x32xf32, #tpu.memory_space<vmem>>, vector<1x4x16x32xf32>,
    } else {
    }
    return
  }
  func.func @transform_0(%arg0: i32, %arg1: i32, %arg2: i32, %arg3: i32) -> (i32, i32, i32, i32) {
    %c0_i32 = arith.constant 0 : i32
    %c0_i32_0 = arith.constant 0 : i32
    return %arg0, %arg1, %arg2, %c0_i32 : i32, i32, i32, i32
  }
  func.func @transform_1(%arg0: i32, %arg1: i32, %arg2: i32, %arg3: i32) -> (i32, i32, i32, i32) {
    %c0_i32 = arith.constant 0 : i32
    %c0_i32_0 = arith.constant 0 : i32
    return %arg0, %arg1, %arg3, %c0_i32 : i32, i32, i32, i32
  }
  func.func @transform_2(%arg0: i32, %arg1: i32, %arg2: i32, %arg3: i32) -> (i32, i32, i32, i32) {
    %c0_i32 = arith.constant 0 : i32
    %c0_i32_0 = arith.constant 0 : i32
    return %arg0, %arg1, %arg3, %c0_i32 : i32, i32, i32, i32
  }
  func.func @transform_3(%arg0: i32, %arg1: i32, %arg2: i32, %arg3: i32) -> (i32, i32, i32, i32) {
    %c0_i32 = arith.constant 0 : i32
    %c0_i32_0 = arith.constant 0 : i32
    return %arg0, %c0_i32, %arg2, %arg3 : i32, i32, i32, i32
  }
  func.func @transform_4(%arg0: i32, %arg1: i32, %arg2: i32, %arg3: i32) -> (i32, i32, i32, i32) {
    %c0_i32 = arith.constant 0 : i32
    %c0_i32_0 = arith.constant 0 : i32
    return %arg0, %arg1, %arg2, %c0_i32 : i32, i32, i32, i32
  }
}

</mosaic_0001>

<llo_original>
// kernel: tpu_custom_call.1
$region0: #{tpu_custom_call.1}
  #allocation0 [shape = 'u32[]', space=smem, size = 0x4, offset = 0x4, fixed_abs, tag = 'smem constant byte address 0x4 - core index']
  #allocation1 [shape = 'u32[72,128]{1,0:T(1,128)}', space=vmem, size = 0x9000, scoped, tag = 'internal scratch']
  #allocation2 [shape = 'f32[4,16,32]{2,1,0:T(8,128)}', space=vmem, size = 0x8000, scoped, tag = 'scratch operand']
  #allocation3 [shape = 'f32[4,16,1]{2,1,0:T(8,128)}', space=vmem, size = 0x8000, scoped, tag = 'scratch operand']
  #allocation4 [shape = 'f32[4,16,1]{2,1,0:T(8,128)}', space=vmem, size = 0x8000, scoped, tag = 'scratch operand']
  #allocation5 [shape = 'f32[4,16,32]{2,1,0:T(8,128)}', space=vmem, size = 0x8000, scoped, tag = 'scratch operand']
  %s0 = inlined_call_operand.hbm [shape: f32[2,4,16,32], index: 0, kind: input, shape index: {}]
  %s1 = inlined_call_operand.hbm [shape: f32[2,4,16,32], index: 1, kind: input, shape index: {}]
  %s2 = inlined_call_operand.hbm [shape: f32[2,4,16,32], index: 2, kind: input, shape index: {}]
  %s3 = inlined_call_operand.hbm [shape: f32[2,1,16,16], index: 3, kind: input, shape index: {}]
  %s4 = inlined_call_operand.hbm [shape: f32[2,4,16,32], index: 4, kind: output, shape index: {}]
  %s5 = sld [smem:[#allocation0]]
  $region73: #{tpu_custom_call.1} parent=0
    _
  %s7 = ssub.s32 1, %s5
  %s8 = scalar_select 0, %s7, %s5
  $region1: #{tpu_custom_call.1} parent=0
    #allocation6 [shape = 'u8[65536]{0}', space=vmem, size = 0x10000, scoped, tag = 'input window, operand 0']
    #allocation7 [shape = 's32[2]{0}', space=sflag, size = 0x8, scoped, tag = 'scoped memory for tpu_custom_call.1']
    #allocation8 [shape = 's32[2]{0}', space=sflag, size = 0x8, scoped, tag = 'scoped memory for tpu_custom_call.1']
    #allocation9 [shape = 'u8[65536]{0}', space=vmem, size = 0x10000, scoped, tag = 'input window, operand 1']
    #allocation10 [shape = 's32[2]{0}', space=sflag, size = 0x8, scoped, tag = 'scoped memory for tpu_custom_call.1']
    #allocation11 [shape = 'u8[65536]{0}', space=vmem, size = 0x10000, scoped, tag = 'input window, operand 2']
    #allocation12 [shape = 'u8[16384]{0}', space=vmem, size = 0x4000, scoped, tag = 'input window, operand 3']
    #allocation13 [shape = 's32[2]{0}', space=sflag, size = 0x8, scoped, tag = 'scoped memory for tpu_custom_call.1']
    #allocation14 [shape = 'u8[65536]{0}', space=vmem, size = 0x10000, scoped, tag = 'output window, operand 0']
    %9 = vsyncpa [#allocation7], 0
    %s10 = scalar_lea.sflag [#allocation7], 1
    %11 = vsyncpa %s10, 0
    %12 = vsyncpa [#allocation10], 0
    %s13 = scalar_lea.sflag [#allocation10], 1
    %14 = vsyncpa %s13, 0
    %15 = vsyncpa [#allocation13], 0
    %s16 = scalar_lea.sflag [#allocation13], 1
    %17 = vsyncpa %s16, 0
    %18 = vsyncpa [#allocation8], 0
    %s19 = scalar_lea.sflag [#allocation8], 1
    %20 = vsyncpa %s19, 0
    loop: start=0, step=1, limit=4
    $region2: #{tpu_custom_call.1} parent=1 // loop_pre_header
      _
    $region3: #{tpu_custom_call.1} parent=1 // loop_header
      %s22 = sphi 0, %s26
      %p23 = scmp.ge.s32.totalorder %s22, 4
      %s29 = sphi 0, %s55
      %s30 = sphi 0, %s51
      %s31 = sphi 0, %s47
      %s32 = sphi 0, %s43
      %s33 = sphi 0, %s29
      %s34 = sphi 0, %s30
      %s35 = sphi 0, %s31
      %s36 = sphi 0, %s32
      %s37 = sphi 0, %s33
      %s38 = sphi 0, %s34
      %s39 = sphi 0, %s35
      %s40 = sphi 0, %s36
      %s62 = sphi 0, %s64
      %s65 = sphi 0, %s62
      %s66 = sphi 0, %s65
      %s82 = sphi 0, %s66
      %s92 = sphi 0, %s94
      %s95 = sphi 0, %s92
      %s96 = sphi 0, %s95
      %s112 = sphi 0, %s96
      %s122 = sphi 0, %s124
      %s125 = sphi 0, %s122
      %s126 = sphi 0, %s125
      %s142 = sphi 0, %s126
      %s152 = sphi 0, %s154
      %s155 = sphi 0, %s152
      %s156 = sphi 0, %s155
      %s172 = sphi 0, %s156
      %s182 = sphi 0, %s184
      %s185 = sphi 0, %s182
      %s186 = sphi 0, %s185
      %s202 = sphi 0, %s186
    $region4: #{tpu_custom_call.1} parent=1 // loop_header_branch
      %25 = sbr.rel (%p23) target = $region8
    $region5: #{tpu_custom_call.1} parent=1 // loop_body
      %s27 = ssub.s32 %s22, 1
      %s28 = ssub.s32 %s22, 2
      %s41 = sadd.s32 1, %s32
      %p42 = scmp.ge.s32.totalorder %s41, 1
      %s43 = scalar_select %p42, 0, %s41
      %s44 = sadd.s32 1, %s31
      %s45 = scalar_select %p42, %s44, %s31
      %p46 = scmp.ge.s32.totalorder %s45, 1
      %s47 = scalar_select %p46, 0, %s45
      %s48 = sadd.s32 1, %s30
      %s49 = scalar_select %p46, %s48, %s30
      %p50 = scmp.ge.s32.totalorder %s49, 1
      %s51 = scalar_select %p50, 0, %s49
      %s52 = sadd.s32 1, %s29
      %s53 = scalar_select %p50, %s52, %s29
      %p54 = scmp.ge.s32.totalorder %s53, 2
      %s55 = scalar_select %p54, 0, %s53
      %s56 = ssub.s32 %s29, %s55
      %s57 = ssub.s32 %s30, %s51
      %s58 = sor.u32 %s56, %s57
      %s59 = ssub.s32 %s31, %s47
      %s60 = sor.u32 %s58, %s59
      %p61 = scmp.eq.s32.totalorder %s60, 0
      %s63 = sadd.s32 %s62, 1
      %s64 = scalar_select %p61, %s62, %s63
      %p67 = pneg %p61
      %p68 = scmp.eq.s32.totalorder %s22, 1
      %p69 = por %p67, %p68
      %p70 = scmp.ne.s32.totalorder %s62, %s65
      %p71 = scmp.eq.s32.totalorder %s22, 0
      %p72 = por %p70, %p71
      %p73 = scmp.ne.s32.totalorder %s62, %s65
      %p74 = scmp.eq.s32.totalorder %s27, 1
      %p75 = por %p73, %p74
      %p76 = scmp.ne.s32.totalorder %s65, %s66
      %p77 = scmp.eq.s32.totalorder %s27, 0
      %p78 = por %p76, %p77
      %p79 = scmp.ne.s32.totalorder %s65, %s66
      %p80 = scmp.eq.s32.totalorder %s28, 1
      %p81 = por %p79, %p80
      %p83 = scmp.ne.s32.totalorder %s66, %s82
      %p84 = scmp.eq.s32.totalorder %s28, 0
      %p85 = por %p83, %p84
      %s86 = ssub.s32 %s29, %s55
      %s87 = ssub.s32 %s30, %s51
      %s88 = sor.u32 %s86, %s87
      %s89 = ssub.s32 %s32, %s43
      %s90 = sor.u32 %s88, %s89
      %p91 = scmp.eq.s32.totalorder %s90, 0
      %s93 = sadd.s32 %s92, 1
      %s94 = scalar_select %p91, %s92, %s93
      %p97 = pneg %p91
      %p98 = scmp.eq.s32.totalorder %s22, 1
      %p99 = por %p97, %p98
      %p100 = scmp.ne.s32.totalorder %s92, %s95
      %p101 = scmp.eq.s32.totalorder %s22, 0
      %p102 = por %p100, %p101
      %p103 = scmp.ne.s32.totalorder %s92, %s95
      %p104 = scmp.eq.s32.totalorder %s27, 1
      %p105 = por %p103, %p104
      %p106 = scmp.ne.s32.totalorder %s95, %s96
      %p107 = scmp.eq.s32.totalorder %s27, 0
      %p108 = por %p106, %p107
      %p109 = scmp.ne.s32.totalorder %s95, %s96
      %p110 = scmp.eq.s32.totalorder %s28, 1
      %p111 = por %p109, %p110
      %p113 = scmp.ne.s32.totalorder %s96, %s112
      %p114 = scmp.eq.s32.totalorder %s28, 0
      %p115 = por %p113, %p114
      %s116 = ssub.s32 %s29, %s55
      %s117 = ssub.s32 %s30, %s51
      %s118 = sor.u32 %s116, %s117
      %s119 = ssub.s32 %s32, %s43
      %s120 = sor.u32 %s118, %s119
      %p121 = scmp.eq.s32.totalorder %s120, 0
      %s123 = sadd.s32 %s122, 1
      %s124 = scalar_select %p121, %s122, %s123
      %p127 = pneg %p121
      %p128 = scmp.eq.s32.totalorder %s22, 1
      %p129 = por %p127, %p128
      %p130 = scmp.ne.s32.totalorder %s122, %s125
      %p131 = scmp.eq.s32.totalorder %s22, 0
      %p132 = por %p130, %p131
      %p133 = scmp.ne.s32.totalorder %s122, %s125
      %p134 = scmp.eq.s32.totalorder %s27, 1
      %p135 = por %p133, %p134
      %p136 = scmp.ne.s32.totalorder %s125, %s126
      %p137 = scmp.eq.s32.totalorder %s27, 0
      %p138 = por %p136, %p137
      %p139 = scmp.ne.s32.totalorder %s125, %s126
      %p140 = scmp.eq.s32.totalorder %s28, 1
      %p141 = por %p139, %p140
      %p143 = scmp.ne.s32.totalorder %s126, %s142
      %p144 = scmp.eq.s32.totalorder %s28, 0
      %p145 = por %p143, %p144
      %s146 = ssub.s32 %s29, %s55
      %s147 = ssub.s32 %s31, %s47
      %s148 = sor.u32 %s146, %s147
      %s149 = ssub.s32 %s32, %s43
      %s150 = sor.u32 %s148, %s149
      %p151 = scmp.eq.s32.totalorder %s150, 0
      %s153 = sadd.s32 %s152, 1
      %s154 = scalar_select %p151, %s152, %s153
      %p157 = pneg %p151
      %p158 = scmp.eq.s32.totalorder %s22, 1
      %p159 = por %p157, %p158
      %p160 = scmp.ne.s32.totalorder %s152, %s155
      %p161 = scmp.eq.s32.totalorder %s22, 0
      %p162 = por %p160, %p161
      %p163 = scmp.ne.s32.totalorder %s152, %s155
      %p164 = scmp.eq.s32.totalorder %s27, 1
      %p165 = por %p163, %p164
      %p166 = scmp.ne.s32.totalorder %s155, %s156
      %p167 = scmp.eq.s32.totalorder %s27, 0
      %p168 = por %p166, %p167
      %p169 = scmp.ne.s32.totalorder %s155, %s156
      %p170 = scmp.eq.s32.totalorder %s28, 1
      %p171 = por %p169, %p170
      %p173 = scmp.ne.s32.totalorder %s156, %s172
      %p174 = scmp.eq.s32.totalorder %s28, 0
      %p175 = por %p173, %p174
      %s176 = ssub.s32 %s29, %s55
      %s177 = ssub.s32 %s30, %s51
      %s178 = sor.u32 %s176, %s177
      %s179 = ssub.s32 %s31, %s47
      %s180 = sor.u32 %s178, %s179
      %p181 = scmp.eq.s32.totalorder %s180, 0
      %s183 = sadd.s32 %s182, 1
      %s184 = scalar_select %p181, %s182, %s183
      %p187 = pneg %p181
      %p188 = scmp.eq.s32.totalorder %s22, 1
      %p189 = por %p187, %p188
      %p190 = scmp.ne.s32.totalorder %s182, %s185
      %p191 = scmp.eq.s32.totalorder %s22, 0
      %p192 = por %p190, %p191
      %p193 = scmp.ne.s32.totalorder %s182, %s185
      %p194 = scmp.eq.s32.totalorder %s27, 1
      %p195 = por %p193, %p194
      %p196 = scmp.ne.s32.totalorder %s185, %s186
      %p197 = scmp.eq.s32.totalorder %s27, 0
      %p198 = por %p196, %p197
      %p199 = scmp.ne.s32.totalorder %s185, %s186
      %p200 = scmp.eq.s32.totalorder %s28, 1
      %p201 = por %p199, %p200
      %p203 = scmp.ne.s32.totalorder %s186, %s202
      %p204 = scmp.eq.s32.totalorder %s28, 0
      %p205 = por %p203, %p204
      %p206 = scmp.le.s32.totalorder 1, %s22
      %p207 = scmp.lt.s32.totalorder %s22, 3
      %p208 = pnand %p206, %p207
      %p209 = pneg %p208
      // Predicated region
      $region9: #{tpu_custom_call.1} parent=5 // pred_check
        _
      $region10: #{tpu_custom_call.1} parent=5 // pred_check_branch
        %211 = sbr.rel (%p208) target = $region12
      $region11: #{tpu_custom_call.1} parent=5 // pred_region
        %s212 = ssub.s32 %s22, 1
      $region12: #{tpu_custom_call.1} parent=5 // pred_fallthru
        _
      %p213 = scmp.lt.s32.totalorder %s22, 2
      // Predicated region
      $region13: #{tpu_custom_call.1} parent=5 // pred_check
        %p214 = pneg %p213
      $region14: #{tpu_custom_call.1} parent=5 // pred_check_branch
        %216 = sbr.rel (%p214) target = $region16
      $region15: #{tpu_custom_call.1} parent=5 // pred_region
        // Predicated region
        $region17: #{tpu_custom_call.1} parent=15 // pred_check
          %p217 = pneg %p72
        $region18: #{tpu_custom_call.1} parent=15 // pred_check_branch
          %219 = sbr.rel (%p217) target = $region20
        $region19: #{tpu_custom_call.1} parent=15 // pred_region
          %s220 = sand.u32 %s62, 1
          %s221 = scalar_lea.sflag [#allocation7], %s220
          %s222 = sand.u32 %s62, 1
          %s223 = smul.addr %s222, 64
          %s224 = scalar_lea.vmem [#allocation6], %s223
          %s225 = smul.u32 4, %s30
          %s226 = smul.u32 2, %s31
          %228 = vsyncadd %s221, 0
          %s229 = smul.addr %s225, 2
          %s230 = sadd.s32 %s226, %s229
          %s231 = smul.addr %s29, 8
          %s232 = sadd.s32 %s230, %s231
          %s233 = smul.addr %s232, 8
          %s234 = scalar_lea.hbm %s0, %s233
          %s235 = sshll.u32 %s234, 4
          %s236 = int_to_ptr.hbm [resolvable:$true] %s235
          %s237 = sshll.u32 %s224, 4
          %s238 = int_to_ptr.vmem [resolvable:$true] %s237
          %243 = dma.hbm_to_vmem [thread:$0]  %s236, 1024, %s238, %s221, 128, 128, 8
        $region20: #{tpu_custom_call.1} parent=15 // pred_fallthru
          _
        // Predicated region
        $region21: #{tpu_custom_call.1} parent=15 // pred_check
          %p244 = pneg %p102
        $region22: #{tpu_custom_call.1} parent=15 // pred_check_branch
          %246 = sbr.rel (%p244) target = $region24
        $region23: #{tpu_custom_call.1} parent=15 // pred_region
          %s247 = sand.u32 %s22, 1
          %s248 = scalar_lea.sflag [#allocation10], %s247
          %s249 = sand.u32 %s92, 1
          %s250 = smul.addr %s249, 64
          %s251 = scalar_lea.vmem [#allocation9], %s250
          %s252 = smul.u32 4, %s30
          %s253 = smul.u32 2, %s32
          %255 = vsyncadd %s248, 0
          %s256 = smul.addr %s252, 2
          %s257 = sadd.s32 %s253, %s256
          %s258 = smul.addr %s29, 8
          %s259 = sadd.s32 %s257, %s258
          %s260 = smul.addr %s259, 8
          %s261 = scalar_lea.hbm %s1, %s260
          %s262 = sshll.u32 %s261, 4
          %s263 = int_to_ptr.hbm [resolvable:$true] %s262
          %s264 = sshll.u32 %s251, 4
          %s265 = int_to_ptr.vmem [resolvable:$true] %s264
          %270 = dma.hbm_to_vmem [thread:$0]  %s263, 1024, %s265, %s248, 128, 128, 8
        $region24: #{tpu_custom_call.1} parent=15 // pred_fallthru
          _
        // Predicated region
        $region25: #{tpu_custom_call.1} parent=15 // pred_check
          %p271 = pneg %p132
        $region26: #{tpu_custom_call.1} parent=15 // pred_check_branch
          %273 = sbr.rel (%p271) target = $region28
        $region27: #{tpu_custom_call.1} parent=15 // pred_region
          %s274 = sand.u32 %s22, 1
          %s275 = scalar_lea.sflag [#allocation10], %s274
          %s276 = sand.u32 %s122, 1
          %s277 = smul.addr %s276, 64
          %s278 = scalar_lea.vmem [#allocation11], %s277
          %s279 = smul.u32 4, %s30
          %s280 = smul.u32 2, %s32
          %282 = vsyncadd %s275, 0
          %s283 = smul.addr %s279, 2
          %s284 = sadd.s32 %s280, %s283
          %s285 = smul.addr %s29, 8
          %s286 = sadd.s32 %s284, %s285
          %s287 = smul.addr %s286, 8
          %s288 = scalar_lea.hbm %s2, %s287
          %s289 = sshll.u32 %s288, 4
          %s290 = int_to_ptr.hbm [resolvable:$true] %s289
          %s291 = sshll.u32 %s278, 4
          %s292 = int_to_ptr.vmem [resolvable:$true] %s291
          %297 = dma.hbm_to_vmem [thread:$0]  %s290, 1024, %s292, %s275, 128, 128, 8
        $region28: #{tpu_custom_call.1} parent=15 // pred_fallthru
          _
        // Predicated region
        $region29: #{tpu_custom_call.1} parent=15 // pred_check
          %p298 = pneg %p162
        $region30: #{tpu_custom_call.1} parent=15 // pred_check_branch
          %300 = sbr.rel (%p298) target = $region32
        $region31: #{tpu_custom_call.1} parent=15 // pred_region
          %s301 = sand.u32 %s152, 1
          %s302 = scalar_lea.sflag [#allocation13], %s301
          %s303 = sand.u32 %s152, 1
          %s304 = smul.addr %s303, 16
          %s305 = scalar_lea.vmem [#allocation12], %s304
          %s306 = smul.u32 2, %s31
          %308 = vsyncadd %s302, 0
          %s309 = sadd.s32 %s32, %s306
          %s310 = smul.addr %s29, 2
          %s311 = sadd.s32 %s309, %s310
          %s312 = smul.addr %s311, 8
          %s313 = scalar_lea.hbm %s3, %s312
          %s314 = sshll.u32 %s313, 4
          %s315 = int_to_ptr.hbm [resolvable:$true] %s314
          %s316 = sshll.u32 %s305, 4
          %s317 = int_to_ptr.vmem [resolvable:$true] %s316
          %322 = dma.hbm_to_vmem [thread:$0]  %s315, 256, %s317, %s302, 128, 128, 8
        $region32: #{tpu_custom_call.1} parent=15 // pred_fallthru
          _
      $region16: #{tpu_custom_call.1} parent=5 // pred_fallthru
        _
      %p323 = scmp.le.s32.totalorder 1, %s22
      %p324 = scmp.lt.s32.totalorder %s22, 3
      %p325 = pnand %p323, %p324
      %p326 = pneg %p325
      // Predicated region
      $region33: #{tpu_custom_call.1} parent=5 // pred_check
        _
      $region34: #{tpu_custom_call.1} parent=5 // pred_check_branch
        %328 = sbr.rel (%p325) target = $region36
      $region35: #{tpu_custom_call.1} parent=5 // pred_region
        %s329 = ssub.s32 %s22, 1
        %s330 = sand.u32 %s65, 1
        %s331 = scalar_lea.sflag [#allocation7], %s330
        %s332 = sand.u32 %s65, 1
        %s333 = smul.addr %s332, 64
        %s334 = scalar_lea.vmem [#allocation6], %s333
        // Predicated region
        $region37: #{tpu_custom_call.1} parent=35 // pred_check
          %p335 = pneg %p78
        $region38: #{tpu_custom_call.1} parent=35 // pred_check_branch
          %337 = sbr.rel (%p335) target = $region40
        $region39: #{tpu_custom_call.1} parent=35 // pred_region
          %339 = dma.done %s331, 1024
        $region40: #{tpu_custom_call.1} parent=35 // pred_fallthru
          _
        %s340 = sand.u32 %s27, 1
        %s341 = scalar_lea.sflag [#allocation10], %s340
        %s342 = sand.u32 %s95, 1
        %s343 = smul.addr %s342, 64
        %s344 = scalar_lea.vmem [#allocation9], %s343
        // Predicated region
        $region41: #{tpu_custom_call.1} parent=35 // pred_check
          %p345 = pneg %p108
        $region42: #{tpu_custom_call.1} parent=35 // pred_check_branch
          %347 = sbr.rel (%p345) target = $region44
        $region43: #{tpu_custom_call.1} parent=35 // pred_region
          %349 = dma.done %s341, 1024
        $region44: #{tpu_custom_call.1} parent=35 // pred_fallthru
          _
        %s350 = sand.u32 %s27, 1
        %s351 = scalar_lea.sflag [#allocation10], %s350
        %s352 = sand.u32 %s125, 1
        %s353 = smul.addr %s352, 64
        %s354 = scalar_lea.vmem [#allocation11], %s353
        // Predicated region
        $region45: #{tpu_custom_call.1} parent=35 // pred_check
          %p355 = pneg %p138
        $region46: #{tpu_custom_call.1} parent=35 // pred_check_branch
          %357 = sbr.rel (%p355) target = $region48
        $region47: #{tpu_custom_call.1} parent=35 // pred_region
          %359 = dma.done %s351, 1024
        $region48: #{tpu_custom_call.1} parent=35 // pred_fallthru
          _
        %s360 = sand.u32 %s155, 1
        %s361 = scalar_lea.sflag [#allocation13], %s360
        %s362 = sand.u32 %s155, 1
        %s363 = smul.addr %s362, 16
        %s364 = scalar_lea.vmem [#allocation12], %s363
        // Predicated region
        $region49: #{tpu_custom_call.1} parent=35 // pred_check
          %p365 = pneg %p168
        $region50: #{tpu_custom_call.1} parent=35 // pred_check_branch
          %367 = sbr.rel (%p365) target = $region52
        $region51: #{tpu_custom_call.1} parent=35 // pred_region
          %369 = dma.done %s361, 256
        $region52: #{tpu_custom_call.1} parent=35 // pred_fallthru
          _
        %s370 = sand.u32 %s65, 1
        %s371 = scalar_lea.sflag [#allocation7], %s370
        %s372 = sand.u32 %s65, 1
        %s373 = smul.addr %s372, 64
        %s374 = scalar_lea.vmem [#allocation6], %s373
        %p375 = pneg %p78
        %p376 = pneg %p75
        %s377 = sand.u32 %s27, 1
        %s378 = scalar_lea.sflag [#allocation10], %s377
        %s379 = sand.u32 %s95, 1
        %s380 = smul.addr %s379, 64
        %s381 = scalar_lea.vmem [#allocation9], %s380
        %p382 = pneg %p108
        %p383 = pneg %p105
        %s384 = sand.u32 %s27, 1
        %s385 = scalar_lea.sflag [#allocation10], %s384
        %s386 = sand.u32 %s125, 1
        %s387 = smul.addr %s386, 64
        %s388 = scalar_lea.vmem [#allocation11], %s387
        %p389 = pneg %p138
        %p390 = pneg %p135
        %s391 = sand.u32 %s155, 1
        %s392 = scalar_lea.sflag [#allocation13], %s391
        %s393 = sand.u32 %s155, 1
        %s394 = smul.addr %s393, 16
        %s395 = scalar_lea.vmem [#allocation12], %s394
        %p396 = pneg %p168
        %p397 = pneg %p165
        %p398 = pneg %p198
        %p399 = pneg %p195
        %s400 = sand.u32 %s185, 1
        %s401 = scalar_lea.sflag [#allocation8], %s400
        %s402 = sand.u32 %s185, 1
        %s403 = smul.addr %s402, 64
        %s404 = scalar_lea.vmem [#allocation14], %s403
        %s405 = smul.u32 4, %s34
        %s406 = smul.u32 2, %s35
        %s407 = smul.u32 4, %s34
        %s408 = smul.u32 2, %s36
        %s409 = smul.u32 4, %s34
        %s410 = smul.u32 2, %s36
        %s411 = smul.u32 2, %s35
        %s412 = smul.u32 4, %s34
        %s413 = smul.u32 2, %s35
        %p414 = scmp.eq.s32.totalorder %s36, 0
        // Predicated region
        $region53: #{tpu_custom_call.1} parent=35 // pred_check
          %p415 = pneg %p414
        $region54: #{tpu_custom_call.1} parent=35 // pred_check_branch
          %417 = sbr.rel (%p415) target = $region56
        $region55: #{tpu_custom_call.1} parent=35 // pred_region
          %v418 = vld [vmem:[%s334] sm:$0xff]
          %v419 = vld [vmem:[%s334 + $0x8] sm:$0xff]
          %v420 = vld [vmem:[%s334 + $0x10] sm:$0xff]
          %v421 = vld [vmem:[%s334 + $0x18] sm:$0xff]
          %v422 = vld [vmem:[%s334 + $0x20] sm:$0xff]
          %v423 = vld [vmem:[%s334 + $0x28] sm:$0xff]
          %v424 = vld [vmem:[%s334 + $0x30] sm:$0xff]
          %v425 = vld [vmem:[%s334 + $0x38] sm:$0xff]
          %v426 = vmul.f32 %v418, 0.25503486
          %v427 = vmul.f32 %v419, 0.25503486
          %v428 = vmul.f32 %v420, 0.25503486
          %v429 = vmul.f32 %v421, 0.25503486
          %v430 = vmul.f32 %v422, 0.25503486
          %v431 = vmul.f32 %v423, 0.25503486
          %v432 = vmul.f32 %v424, 0.25503486
          %v433 = vmul.f32 %v425, 0.25503486
          %vm434 = vcmask 261120
          %435 = vst.msk [vmem:[#allocation2] sm:$0xff] %vm434, %v426
          %436 = vst.msk [vmem:[#allocation2 + $0x8] sm:$0xff] %vm434, %v427
          %437 = vst.msk [vmem:[#allocation2 + $0x10] sm:$0xff] %vm434, %v428
          %438 = vst.msk [vmem:[#allocation2 + $0x18] sm:$0xff] %vm434, %v429
          %439 = vst.msk [vmem:[#allocation2 + $0x20] sm:$0xff] %vm434, %v430
          %440 = vst.msk [vmem:[#allocation2 + $0x28] sm:$0xff] %vm434, %v431
          %441 = vst.msk [vmem:[#allocation2 + $0x30] sm:$0xff] %vm434, %v432
          %442 = vst.msk [vmem:[#allocation2 + $0x38] sm:$0xff] %vm434, %v433
          %vm443 = vcmask 7168
          %444 = vst.msk [vmem:[#allocation3] sm:$0xff] %vm443, -inf
          %445 = vst.msk [vmem:[#allocation3 + $0x8] sm:$0xff] %vm443, -inf
          %446 = vst.msk [vmem:[#allocation3 + $0x10] sm:$0xff] %vm443, -inf
          %447 = vst.msk [vmem:[#allocation3 + $0x18] sm:$0xff] %vm443, -inf
          %448 = vst.msk [vmem:[#allocation3 + $0x20] sm:$0xff] %vm443, -inf
          %449 = vst.msk [vmem:[#allocation3 + $0x28] sm:$0xff] %vm443, -inf
          %450 = vst.msk [vmem:[#allocation3 + $0x30] sm:$0xff] %vm443, -inf
          %451 = vst.msk [vmem:[#allocation3 + $0x38] sm:$0xff] %vm443, -inf
          %452 = vst.msk [vmem:[#allocation4] sm:$0xff] %vm443, 0.0
          %453 = vst.msk [vmem:[#allocation4 + $0x8] sm:$0xff] %vm443, 0.0
          %454 = vst.msk [vmem:[#allocation4 + $0x10] sm:$0xff] %vm443, 0.0
          %455 = vst.msk [vmem:[#allocation4 + $0x18] sm:$0xff] %vm443, 0.0
          %456 = vst.msk [vmem:[#allocation4 + $0x20] sm:$0xff] %vm443, 0.0
          %457 = vst.msk [vmem:[#allocation4 + $0x28] sm:$0xff] %vm443, 0.0
          %458 = vst.msk [vmem:[#allocation4 + $0x30] sm:$0xff] %vm443, 0.0
          %459 = vst.msk [vmem:[#allocation4 + $0x38] sm:$0xff] %vm443, 0.0
          %460 = vst.msk [vmem:[#allocation5] sm:$0xff] %vm434, 0.0
          %461 = vst.msk [vmem:[#allocation5 + $0x8] sm:$0xff] %vm434, 0.0
          %462 = vst.msk [vmem:[#allocation5 + $0x10] sm:$0xff] %vm434, 0.0
          %463 = vst.msk [vmem:[#allocation5 + $0x18] sm:$0xff] %vm434, 0.0
          %464 = vst.msk [vmem:[#allocation5 + $0x20] sm:$0xff] %vm434, 0.0
          %465 = vst.msk [vmem:[#allocation5 + $0x28] sm:$0xff] %vm434, 0.0
          %466 = vst.msk [vmem:[#allocation5 + $0x30] sm:$0xff] %vm434, 0.0
          %467 = vst.msk [vmem:[#allocation5 + $0x38] sm:$0xff] %vm434, 0.0
        $region56: #{tpu_custom_call.1} parent=35 // pred_fallthru
          _
        %v468 = vld [vmem:[#allocation2] sm:$0xff]
        %v469 = vld [vmem:[#allocation2 + $0x8] sm:$0xff]
        %v470 = vld [vmem:[#allocation2 + $0x10] sm:$0xff]
        %v471 = vld [vmem:[#allocation2 + $0x18] sm:$0xff]
        %v472 = vld [vmem:[#allocation2 + $0x20] sm:$0xff]
        %v473 = vld [vmem:[#allocation2 + $0x28] sm:$0xff]
        %v474 = vld [vmem:[#allocation2 + $0x30] sm:$0xff]
        %v475 = vld [vmem:[#allocation2 + $0x38] sm:$0xff]
        %v476 = vld [vmem:[%s344] sm:$0xff]
        %v477 = vld [vmem:[%s344 + $0x8] sm:$0xff]
        %v478 = vld [vmem:[%s344 + $0x10] sm:$0xff]
        %v479 = vld [vmem:[%s344 + $0x18] sm:$0xff]
        %v480 = vld [vmem:[%s344 + $0x20] sm:$0xff]
        %v481 = vld [vmem:[%s344 + $0x28] sm:$0xff]
        %v482 = vld [vmem:[%s344 + $0x30] sm:$0xff]
        %v483 = vld [vmem:[%s344 + $0x38] sm:$0xff]
        %v484 = vld [vmem:[%s354] sm:$0xff]
        %v485 = vld [vmem:[%s354 + $0x8] sm:$0xff]
        %v486 = vld [vmem:[%s354 + $0x10] sm:$0xff]
        %v487 = vld [vmem:[%s354 + $0x18] sm:$0xff]
        %v488 = vld [vmem:[%s354 + $0x20] sm:$0xff]
        %v489 = vld [vmem:[%s354 + $0x28] sm:$0xff]
        %v490 = vld [vmem:[%s354 + $0x30] sm:$0xff]
        %v491 = vld [vmem:[%s354 + $0x38] sm:$0xff]
        %v492 = vld [vmem:[%s364] sm:$0xff]
        %v493 = vld [vmem:[%s364 + $0x8] sm:$0xff]
        %v494 = vmul.f32 %v492, 1.442695
        %v495 = vmul.f32 %v493, 1.442695
        %vm496 = vcmask 261120
        %v498 = vsel %vm496, %v468, 0
        %v501 = vsel %vm496, %v469, 0
        %v504 = vsel %vm496, %v476, 0
        %v507 = vsel %vm496, %v477, 0
        %509 = vmatpush.xpose.msra.mxu0 0.0
        %510 = vmatpush.xpose.msra.mxu0 0.0
        %511 = vmatpush.xpose.msra.mxu0 0.0
        %512 = vmatpush.xpose.msra.mxu0 0.0
        %513 = vmatpush.xpose.msra.mxu0 0.0
        %514 = vmatpush.xpose.msra.mxu0 0.0
        %515 = vmatpush.xpose.msra.mxu0 0.0
        %516 = vmatpush.xpose.msra.mxu0 0.0
        %517 = vmatpush.xpose.msra.mxu0 0.0
        %518 = vmatpush.xpose.msra.mxu0 0.0
        %519 = vmatpush.xpose.msra.mxu0 0.0
        %520 = vmatpush.xpose.msra.mxu0 0.0
        %521 = vmatpush.xpose.msra.mxu0 0.0
        %522 = vmatpush.xpose.msra.mxu0 0.0
        %523 = vmatpush.xpose.msra.mxu0 %v507
        %524 = vmatpush.xpose.msra.mxu0 %v504
        %525 = vmatmul.f32.gmra.mxu0 %v498
        %v526 = vpop.f32.mrf.mxu0
        %v527 = vadd.f32 %v494, %v526
        %528 = vmatmul.f32.gmra.mxu0 %v501
        %v529 = vpop.f32.mrf.mxu0
        %v530 = vadd.f32 %v495, %v529
        %531 = vdwg.mxu0
        %v533 = vsel %vm496, %v470, 0
        %v536 = vsel %vm496, %v471, 0
        %v539 = vsel %vm496, %v478, 0
        %v542 = vsel %vm496, %v479, 0
        %544 = vmatpush.xpose.msra.mxu0 0.0
        %545 = vmatpush.xpose.msra.mxu0 0.0
        %546 = vmatpush.xpose.msra.mxu0 0.0
        %547 = vmatpush.xpose.msra.mxu0 0.0
        %548 = vmatpush.xpose.msra.mxu0 0.0
        %549 = vmatpush.xpose.msra.mxu0 0.0
        %550 = vmatpush.xpose.msra.mxu0 0.0
        %551 = vmatpush.xpose.msra.mxu0 0.0
        %552 = vmatpush.xpose.msra.mxu0 0.0
        %553 = vmatpush.xpose.msra.mxu0 0.0
        %554 = vmatpush.xpose.msra.mxu0 0.0
        %555 = vmatpush.xpose.msra.mxu0 0.0
        %556 = vmatpush.xpose.msra.mxu0 0.0
        %557 = vmatpush.xpose.msra.mxu0 0.0
        %558 = vmatpush.xpose.msra.mxu0 %v542
        %559 = vmatpush.xpose.msra.mxu0 %v539
        %560 = vmatmul.f32.gmra.mxu0 %v533
        %v561 = vpop.f32.mrf.mxu0
        %v562 = vadd.f32 %v494, %v561
        %563 = vmatmul.f32.gmra.mxu0 %v536
        %v564 = vpop.f32.mrf.mxu0
        %v565 = vadd.f32 %v495, %v564
        %566 = vdwg.mxu0
        %v568 = vsel %vm496, %v472, 0
        %v571 = vsel %vm496, %v473, 0
        %v574 = vsel %vm496, %v480, 0
        %v577 = vsel %vm496, %v481, 0
        %579 = vmatpush.xpose.msra.mxu0 0.0
        %580 = vmatpush.xpose.msra.mxu0 0.0
        %581 = vmatpush.xpose.msra.mxu0 0.0
        %582 = vmatpush.xpose.msra.mxu0 0.0
        %583 = vmatpush.xpose.msra.mxu0 0.0
        %584 = vmatpush.xpose.msra.mxu0 0.0
        %585 = vmatpush.xpose.msra.mxu0 0.0
        %586 = vmatpush.xpose.msra.mxu0 0.0
        %587 = vmatpush.xpose.msra.mxu0 0.0
        %588 = vmatpush.xpose.msra.mxu0 0.0
        %589 = vmatpush.xpose.msra.mxu0 0.0
        %590 = vmatpush.xpose.msra.mxu0 0.0
        %591 = vmatpush.xpose.msra.mxu0 0.0
        %592 = vmatpush.xpose.msra.mxu0 0.0
        %593 = vmatpush.xpose.msra.mxu0 %v577
        %594 = vmatpush.xpose.msra.mxu0 %v574
        %595 = vmatmul.f32.gmra.mxu0 %v568
        %v596 = vpop.f32.mrf.mxu0
        %v597 = vadd.f32 %v494, %v596
        %598 = vmatmul.f32.gmra.mxu0 %v571
        %v599 = vpop.f32.mrf.mxu0
        %v600 = vadd.f32 %v495, %v599
        %601 = vdwg.mxu0
        %v603 = vsel %vm496, %v474, 0
        %v606 = vsel %vm496, %v475, 0
        %v609 = vsel %vm496, %v482, 0
        %v612 = vsel %vm496, %v483, 0
        %614 = vmatpush.xpose.msra.mxu0 0.0
        %615 = vmatpush.xpose.msra.mxu0 0.0
        %616 = vmatpush.xpose.msra.mxu0 0.0
        %617 = vmatpush.xpose.msra.mxu0 0.0
        %618 = vmatpush.xpose.msra.mxu0 0.0
        %619 = vmatpush.xpose.msra.mxu0 0.0
        %620 = vmatpush.xpose.msra.mxu0 0.0
        %621 = vmatpush.xpose.msra.mxu0 0.0
        %622 = vmatpush.xpose.msra.mxu0 0.0
        %623 = vmatpush.xpose.msra.mxu0 0.0
        %624 = vmatpush.xpose.msra.mxu0 0.0
        %625 = vmatpush.xpose.msra.mxu0 0.0
        %626 = vmatpush.xpose.msra.mxu0 0.0
        %627 = vmatpush.xpose.msra.mxu0 0.0
        %628 = vmatpush.xpose.msra.mxu0 %v612
        %629 = vmatpush.xpose.msra.mxu0 %v609
        %630 = vmatmul.f32.gmra.mxu0 %v603
        %v631 = vpop.f32.mrf.mxu0
        %v632 = vadd.f32 %v494, %v631
        %633 = vmatmul.f32.gmra.mxu0 %v606
        %v634 = vpop.f32.mrf.mxu0
        %v635 = vadd.f32 %v495, %v634
        %636 = vdwg.mxu0
        %v637 = vld [vmem:[#allocation3] sm:$0xff]
        %v638 = vld [vmem:[#allocation3 + $0x8] sm:$0xff]
        %v639 = vld [vmem:[#allocation3 + $0x10] sm:$0xff]
        %v640 = vld [vmem:[#allocation3 + $0x18] sm:$0xff]
        %v641 = vld [vmem:[#allocation3 + $0x20] sm:$0xff]
        %v642 = vld [vmem:[#allocation3 + $0x28] sm:$0xff]
        %v643 = vld [vmem:[#allocation3 + $0x30] sm:$0xff]
        %v644 = vld [vmem:[#allocation3 + $0x38] sm:$0xff]
        %vm645 = vcmask 130048
        %v646 = vsel %vm645, %v527, -inf
        %647 = vmax.xlane.f32.xlu0 %v646
        %v648 = vpop.xlane.xlu0 %647
        %v649 = vsel %vm645, %v530, -inf
        %650 = vmax.xlane.f32.xlu0 %v649
        %v651 = vpop.xlane.xlu0 %650
        %v652 = vsel %vm645, %v562, -inf
        %653 = vmax.xlane.f32.xlu0 %v652
        %v654 = vpop.xlane.xlu0 %653
        %v655 = vsel %vm645, %v565, -inf
        %656 = vmax.xlane.f32.xlu0 %v655
        %v657 = vpop.xlane.xlu0 %656
        %v658 = vsel %vm645, %v597, -inf
        %659 = vmax.xlane.f32.xlu0 %v658
        %v660 = vpop.xlane.xlu0 %659
        %v661 = vsel %vm645, %v600, -inf
        %662 = vmax.xlane.f32.xlu0 %v661
        %v663 = vpop.xlane.xlu0 %662
        %v664 = vsel %vm645, %v632, -inf
        %665 = vmax.xlane.f32.xlu0 %v664
        %v666 = vpop.xlane.xlu0 %665
        %v667 = vsel %vm645, %v635, -inf
        %668 = vmax.xlane.f32.xlu0 %v667
        %v669 = vpop.xlane.xlu0 %668
        %v670 = vmax.f32 %v637, %v648
        %v671 = vmax.f32 %v638, %v651
        %v672 = vmax.f32 %v639, %v654
        %v673 = vmax.f32 %v640, %v657
        %v674 = vmax.f32 %v641, %v660
        %v675 = vmax.f32 %v642, %v663
        %v676 = vmax.f32 %v643, %v666
        %v677 = vmax.f32 %v644, %v669
        %v678 = vmax.f32 %v670, -1e+30
        %v679 = vmax.f32 %v671, -1e+30
        %v680 = vmax.f32 %v672, -1e+30
        %v681 = vmax.f32 %v673, -1e+30
        %v682 = vmax.f32 %v674, -1e+30
        %v683 = vmax.f32 %v675, -1e+30
        %v684 = vmax.f32 %v676, -1e+30
        %v685 = vmax.f32 %v677, -1e+30
        %v686 = vsub.f32 %v637, %v678
        %v687 = vsub.f32 %v638, %v679
        %v688 = vsub.f32 %v639, %v680
        %v689 = vsub.f32 %v640, %v681
        %v690 = vsub.f32 %v641, %v682
        %v691 = vsub.f32 %v642, %v683
        %v692 = vsub.f32 %v643, %v684
        %v693 = vsub.f32 %v644, %v685
        %v694 = vpow.pop %v686
        %v695 = vpow.pop %v687
        %v696 = vpow.pop %v688
        %v697 = vpow.pop %v689
        %v698 = vpow.pop %v690
        %v699 = vpow.pop %v691
        %v700 = vpow.pop %v692
        %v701 = vpow.pop %v693
        %703 = vset.pattern.permute.xlu0 0
        %704 = vperm.xlu0 %703, %v678
        %v705 = vpop.permute.xlu0 %704
        %708 = vset.pattern.permute.xlu0 0
        %709 = vperm.xlu0 %708, %v679
        %v710 = vpop.permute.xlu0 %709
        %713 = vset.pattern.permute.xlu0 0
        %714 = vperm.xlu0 %713, %v680
        %v715 = vpop.permute.xlu0 %714
        %718 = vset.pattern.permute.xlu0 0
        %719 = vperm.xlu0 %718, %v681
        %v720 = vpop.permute.xlu0 %719
        %723 = vset.pattern.permute.xlu0 0
        %724 = vperm.xlu0 %723, %v682
        %v725 = vpop.permute.xlu0 %724
        %728 = vset.pattern.permute.xlu0 0
        %729 = vperm.xlu0 %728, %v683
        %v730 = vpop.permute.xlu0 %729
        %733 = vset.pattern.permute.xlu0 0
        %734 = vperm.xlu0 %733, %v684
        %v735 = vpop.permute.xlu0 %734
        %738 = vset.pattern.permute.xlu0 0
        %739 = vperm.xlu0 %738, %v685
        %v740 = vpop.permute.xlu0 %739
        %v742 = vsub.f32 %v527, %v705
        %v743 = vsub.f32 %v530, %v710
        %v744 = vsub.f32 %v562, %v715
        %v745 = vsub.f32 %v565, %v720
        %v746 = vsub.f32 %v597, %v725
        %v747 = vsub.f32 %v600, %v730
        %v748 = vsub.f32 %v632, %v735
        %v749 = vsub.f32 %v635, %v740
        %v750 = vpow.pop %v742
        %v751 = vpow.pop %v743
        %v752 = vpow.pop %v744
        %v753 = vpow.pop %v745
        %v754 = vpow.pop %v746
        %v755 = vpow.pop %v747
        %v756 = vpow.pop %v748
        %v757 = vpow.pop %v749
        %v758 = vld [vmem:[#allocation4] sm:$0xff]
        %v759 = vld [vmem:[#allocation4 + $0x8] sm:$0xff]
        %v760 = vld [vmem:[#allocation4 + $0x10] sm:$0xff]
        %v761 = vld [vmem:[#allocation4 + $0x18] sm:$0xff]
        %v762 = vld [vmem:[#allocation4 + $0x20] sm:$0xff]
        %v763 = vld [vmem:[#allocation4 + $0x28] sm:$0xff]
        %v764 = vld [vmem:[#allocation4 + $0x30] sm:$0xff]
        %v765 = vld [vmem:[#allocation4 + $0x38] sm:$0xff]
        %v766 = vmul.f32 %v694, %v758
        %v767 = vmul.f32 %v695, %v759
        %v768 = vmul.f32 %v696, %v760
        %v769 = vmul.f32 %v697, %v761
        %v770 = vmul.f32 %v698, %v762
        %v771 = vmul.f32 %v699, %v763
        %v772 = vmul.f32 %v700, %v764
        %v773 = vmul.f32 %v701, %v765
        %v774 = vsel %vm645, %v750, 0.0
        %775 = vadd.xlane.f32.xlu0 %v774
        %v776 = vpop.xlane.xlu0 %775
        %v777 = vsel %vm645, %v751, 0.0
        %778 = vadd.xlane.f32.xlu0 %v777
        %v779 = vpop.xlane.xlu0 %778
        %v780 = vsel %vm645, %v752, 0.0
        %781 = vadd.xlane.f32.xlu0 %v780
        %v782 = vpop.xlane.xlu0 %781
        %v783 = vsel %vm645, %v753, 0.0
        %784 = vadd.xlane.f32.xlu0 %v783
        %v785 = vpop.xlane.xlu0 %784
        %v786 = vsel %vm645, %v754, 0.0
        %787 = vadd.xlane.f32.xlu0 %v786
        %v788 = vpop.xlane.xlu0 %787
        %v789 = vsel %vm645, %v755, 0.0
        %790 = vadd.xlane.f32.xlu0 %v789
        %v791 = vpop.xlane.xlu0 %790
        %v792 = vsel %vm645, %v756, 0.0
        %793 = vadd.xlane.f32.xlu0 %v792
        %v794 = vpop.xlane.xlu0 %793
        %v795 = vsel %vm645, %v757, 0.0
        %796 = vadd.xlane.f32.xlu0 %v795
        %v797 = vpop.xlane.xlu0 %796
        %v798 = vadd.f32 %v766, %v776
        %v799 = vadd.f32 %v767, %v779
        %v800 = vadd.f32 %v768, %v782
        %v801 = vadd.f32 %v769, %v785
        %v802 = vadd.f32 %v770, %v788
        %v803 = vadd.f32 %v771, %v791
        %v804 = vadd.f32 %v772, %v794
        %v805 = vadd.f32 %v773, %v797
        %vm806 = vcmask 7168
        %807 = vst.msk [vmem:[#allocation4] sm:$0xff] %vm806, %v798
        %808 = vst.msk [vmem:[#allocation4 + $0x8] sm:$0xff] %vm806, %v799
        %809 = vst.msk [vmem:[#allocation4 + $0x10] sm:$0xff] %vm806, %v800
        %810 = vst.msk [vmem:[#allocation4 + $0x18] sm:$0xff] %vm806, %v801
        %811 = vst.msk [vmem:[#allocation4 + $0x20] sm:$0xff] %vm806, %v802
        %812 = vst.msk [vmem:[#allocation4 + $0x28] sm:$0xff] %vm806, %v803
        %813 = vst.msk [vmem:[#allocation4 + $0x30] sm:$0xff] %vm806, %v804
        %814 = vst.msk [vmem:[#allocation4 + $0x38] sm:$0xff] %vm806, %v805
        %v816 = vsel %vm645, %v750, 0
        %v819 = vsel %vm645, %v751, 0
        %821 = vmatpush.msra.mxu0 0.0
        %822 = vmatpush.msra.mxu0 0.0
        %823 = vmatpush.msra.mxu0 0.0
        %824 = vmatpush.msra.mxu0 0.0
        %825 = vmatpush.msra.mxu0 0.0
        %826 = vmatpush.msra.mxu0 0.0
        %827 = vmatpush.msra.mxu0 0.0
        %828 = vmatpush.msra.mxu0 0.0
        %829 = vmatpush.msra.mxu0 0.0
        %830 = vmatpush.msra.mxu0 0.0
        %831 = vmatpush.msra.mxu0 0.0
        %832 = vmatpush.msra.mxu0 0.0
        %833 = vmatpush.msra.mxu0 0.0
        %834 = vmatpush.msra.mxu0 0.0
        %835 = vmatpush.msra.mxu0 %v485
        %836 = vmatpush.msra.mxu0 %v484
        %837 = vmatmul.f32.gmra.mxu0 %v816
        %v838 = vpop.f32.mrf.mxu0
        %v839 = vadd.f32 0.0, %v838
        %840 = vmatmul.f32.gmra.mxu0 %v819
        %v841 = vpop.f32.mrf.mxu0
        %v842 = vadd.f32 0.0, %v841
        %843 = vdwg.mxu0
        %v845 = vsel %vm645, %v752, 0
        %v848 = vsel %vm645, %v753, 0
        %850 = vmatpush.msra.mxu0 0.0
        %851 = vmatpush.msra.mxu0 0.0
        %852 = vmatpush.msra.mxu0 0.0
        %853 = vmatpush.msra.mxu0 0.0
        %854 = vmatpush.msra.mxu0 0.0
        %855 = vmatpush.msra.mxu0 0.0
        %856 = vmatpush.msra.mxu0 0.0
        %857 = vmatpush.msra.mxu0 0.0
        %858 = vmatpush.msra.mxu0 0.0
        %859 = vmatpush.msra.mxu0 0.0
        %860 = vmatpush.msra.mxu0 0.0
        %861 = vmatpush.msra.mxu0 0.0
        %862 = vmatpush.msra.mxu0 0.0
        %863 = vmatpush.msra.mxu0 0.0
        %864 = vmatpush.msra.mxu0 %v487
        %865 = vmatpush.msra.mxu0 %v486
        %866 = vmatmul.f32.gmra.mxu0 %v845
        %v867 = vpop.f32.mrf.mxu0
        %v868 = vadd.f32 0.0, %v867
        %869 = vmatmul.f32.gmra.mxu0 %v848
        %v870 = vpop.f32.mrf.mxu0
        %v871 = vadd.f32 0.0, %v870
        %872 = vdwg.mxu0
        %v874 = vsel %vm645, %v754, 0
        %v877 = vsel %vm645, %v755, 0
        %879 = vmatpush.msra.mxu0 0.0
        %880 = vmatpush.msra.mxu0 0.0
        %881 = vmatpush.msra.mxu0 0.0
        %882 = vmatpush.msra.mxu0 0.0
        %883 = vmatpush.msra.mxu0 0.0
        %884 = vmatpush.msra.mxu0 0.0
        %885 = vmatpush.msra.mxu0 0.0
        %886 = vmatpush.msra.mxu0 0.0
        %887 = vmatpush.msra.mxu0 0.0
        %888 = vmatpush.msra.mxu0 0.0
        %889 = vmatpush.msra.mxu0 0.0
        %890 = vmatpush.msra.mxu0 0.0
        %891 = vmatpush.msra.mxu0 0.0
        %892 = vmatpush.msra.mxu0 0.0
        %893 = vmatpush.msra.mxu0 %v489
        %894 = vmatpush.msra.mxu0 %v488
        %895 = vmatmul.f32.gmra.mxu0 %v874
        %v896 = vpop.f32.mrf.mxu0
        %v897 = vadd.f32 0.0, %v896
        %898 = vmatmul.f32.gmra.mxu0 %v877
        %v899 = vpop.f32.mrf.mxu0
        %v900 = vadd.f32 0.0, %v899
        %901 = vdwg.mxu0
        %v903 = vsel %vm645, %v756, 0
        %v906 = vsel %vm645, %v757, 0
        %908 = vmatpush.msra.mxu0 0.0
        %909 = vmatpush.msra.mxu0 0.0
        %910 = vmatpush.msra.mxu0 0.0
        %911 = vmatpush.msra.mxu0 0.0
        %912 = vmatpush.msra.mxu0 0.0
        %913 = vmatpush.msra.mxu0 0.0
        %914 = vmatpush.msra.mxu0 0.0
        %915 = vmatpush.msra.mxu0 0.0
        %916 = vmatpush.msra.mxu0 0.0
        %917 = vmatpush.msra.mxu0 0.0
        %918 = vmatpush.msra.mxu0 0.0
        %919 = vmatpush.msra.mxu0 0.0
        %920 = vmatpush.msra.mxu0 0.0
        %921 = vmatpush.msra.mxu0 0.0
        %922 = vmatpush.msra.mxu0 %v491
        %923 = vmatpush.msra.mxu0 %v490
        %924 = vmatmul.f32.gmra.mxu0 %v903
        %v925 = vpop.f32.mrf.mxu0
        %v926 = vadd.f32 0.0, %v925
        %927 = vmatmul.f32.gmra.mxu0 %v906
        %v928 = vpop.f32.mrf.mxu0
        %v929 = vadd.f32 0.0, %v928
        %930 = vdwg.mxu0
        %v931 = vld [vmem:[#allocation5] sm:$0xff]
        %v932 = vld [vmem:[#allocation5 + $0x8] sm:$0xff]
        %v933 = vld [vmem:[#allocation5 + $0x10] sm:$0xff]
        %v934 = vld [vmem:[#allocation5 + $0x18] sm:$0xff]
        %v935 = vld [vmem:[#allocation5 + $0x20] sm:$0xff]
        %v936 = vld [vmem:[#allocation5 + $0x28] sm:$0xff]
        %v937 = vld [vmem:[#allocation5 + $0x30] sm:$0xff]
        %v938 = vld [vmem:[#allocation5 + $0x38] sm:$0xff]
        %940 = vset.pattern.permute.xlu0 0
        %941 = vperm.xlu0 %940, %v694
        %v942 = vpop.permute.xlu0 %941
        %945 = vset.pattern.permute.xlu0 0
        %946 = vperm.xlu0 %945, %v695
        %v947 = vpop.permute.xlu0 %946
        %950 = vset.pattern.permute.xlu0 0
        %951 = vperm.xlu0 %950, %v696
        %v952 = vpop.permute.xlu0 %951
        %955 = vset.pattern.permute.xlu0 0
        %956 = vperm.xlu0 %955, %v697
        %v957 = vpop.permute.xlu0 %956
        %960 = vset.pattern.permute.xlu0 0
        %961 = vperm.xlu0 %960, %v698
        %v962 = vpop.permute.xlu0 %961
        %965 = vset.pattern.permute.xlu0 0
        %966 = vperm.xlu0 %965, %v699
        %v967 = vpop.permute.xlu0 %966
        %970 = vset.pattern.permute.xlu0 0
        %971 = vperm.xlu0 %970, %v700
        %v972 = vpop.permute.xlu0 %971
        %975 = vset.pattern.permute.xlu0 0
        %976 = vperm.xlu0 %975, %v701
        %v977 = vpop.permute.xlu0 %976
        %v979 = vmul.f32 %v942, %v931
        %v980 = vmul.f32 %v947, %v932
        %v981 = vmul.f32 %v952, %v933
        %v982 = vmul.f32 %v957, %v934
        %v983 = vmul.f32 %v962, %v935
        %v984 = vmul.f32 %v967, %v936
        %v985 = vmul.f32 %v972, %v937
        %v986 = vmul.f32 %v977, %v938
        %v987 = vadd.f32 %v979, %v839
        %v988 = vadd.f32 %v980, %v842
        %v989 = vadd.f32 %v981, %v868
        %v990 = vadd.f32 %v982, %v871
        %v991 = vadd.f32 %v983, %v897
        %v992 = vadd.f32 %v984, %v900
        %v993 = vadd.f32 %v985, %v926
        %v994 = vadd.f32 %v986, %v929
        %995 = vst.msk [vmem:[#allocation5] sm:$0xff] %vm496, %v987
        %996 = vst.msk [vmem:[#allocation5 + $0x8] sm:$0xff] %vm496, %v988
        %997 = vst.msk [vmem:[#allocation5 + $0x10] sm:$0xff] %vm496, %v989
        %998 = vst.msk [vmem:[#allocation5 + $0x18] sm:$0xff] %vm496, %v990
        %999 = vst.msk [vmem:[#allocation5 + $0x20] sm:$0xff] %vm496, %v991
        %1000 = vst.msk [vmem:[#allocation5 + $0x28] sm:$0xff] %vm496, %v992
        %1001 = vst.msk [vmem:[#allocation5 + $0x30] sm:$0xff] %vm496, %v993
        %1002 = vst.msk [vmem:[#allocation5 + $0x38] sm:$0xff] %vm496, %v994
        %1003 = vst.msk [vmem:[#allocation3] sm:$0xff] %vm806, %v678
        %1004 = vst.msk [vmem:[#allocation3 + $0x8] sm:$0xff] %vm806, %v679
        %1005 = vst.msk [vmem:[#allocation3 + $0x10] sm:$0xff] %vm806, %v680
        %1006 = vst.msk [vmem:[#allocation3 + $0x18] sm:$0xff] %vm806, %v681
        %1007 = vst.msk [vmem:[#allocation3 + $0x20] sm:$0xff] %vm806, %v682
        %1008 = vst.msk [vmem:[#allocation3 + $0x28] sm:$0xff] %vm806, %v683
        %1009 = vst.msk [vmem:[#allocation3 + $0x30] sm:$0xff] %vm806, %v684
        %1010 = vst.msk [vmem:[#allocation3 + $0x38] sm:$0xff] %vm806, %v685
        // Predicated region
        $region57: #{tpu_custom_call.1} parent=35 // pred_check
          %p1011 = pneg %p414
        $region58: #{tpu_custom_call.1} parent=35 // pred_check_branch
          %1013 = sbr.rel (%p1011) target = $region60
        $region59: #{tpu_custom_call.1} parent=35 // pred_region
          %v1014 = vld [vmem:[#allocation4] sm:$0xff]
          %v1015 = vld [vmem:[#allocation4 + $0x8] sm:$0xff]
          %v1016 = vld [vmem:[#allocation4 + $0x10] sm:$0xff]
          %v1017 = vld [vmem:[#allocation4 + $0x18] sm:$0xff]
          %v1018 = vld [vmem:[#allocation4 + $0x20] sm:$0xff]
          %v1019 = vld [vmem:[#allocation4 + $0x28] sm:$0xff]
          %v1020 = vld [vmem:[#allocation4 + $0x30] sm:$0xff]
          %v1021 = vld [vmem:[#allocation4 + $0x38] sm:$0xff]
          %v1022 = vrcp.pop %v1014
          %v1023 = vrcp.pop %v1015
          %v1024 = vrcp.pop %v1016
          %v1025 = vrcp.pop %v1017
          %v1026 = vrcp.pop %v1018
          %v1027 = vrcp.pop %v1019
          %v1028 = vrcp.pop %v1020
          %v1029 = vrcp.pop %v1021
          %v1030 = vmul.f32 %v1014, %v1022
          %v1031 = vmul.f32 %v1015, %v1023
          %v1032 = vmul.f32 %v1016, %v1024
          %v1033 = vmul.f32 %v1017, %v1025
          %v1034 = vmul.f32 %v1018, %v1026
          %v1035 = vmul.f32 %v1019, %v1027
          %v1036 = vmul.f32 %v1020, %v1028
          %v1037 = vmul.f32 %v1021, %v1029
          %v1038 = vsub.f32 2.0, %v1030
          %v1039 = vsub.f32 2.0, %v1031
          %v1040 = vsub.f32 2.0, %v1032
          %v1041 = vsub.f32 2.0, %v1033
          %v1042 = vsub.f32 2.0, %v1034
          %v1043 = vsub.f32 2.0, %v1035
          %v1044 = vsub.f32 2.0, %v1036
          %v1045 = vsub.f32 2.0, %v1037
          %v1046 = vmul.f32 %v1022, %v1038
          %v1047 = vmul.f32 %v1023, %v1039
          %v1048 = vmul.f32 %v1024, %v1040
          %v1049 = vmul.f32 %v1025, %v1041
          %v1050 = vmul.f32 %v1026, %v1042
          %v1051 = vmul.f32 %v1027, %v1043
          %v1052 = vmul.f32 %v1028, %v1044
          %v1053 = vmul.f32 %v1029, %v1045
          %v1054 = vld [vmem:[#allocation5] sm:$0xff]
          %v1055 = vld [vmem:[#allocation5 + $0x8] sm:$0xff]
          %v1056 = vld [vmem:[#allocation5 + $0x10] sm:$0xff]
          %v1057 = vld [vmem:[#allocation5 + $0x18] sm:$0xff]
          %v1058 = vld [vmem:[#allocation5 + $0x20] sm:$0xff]
          %v1059 = vld [vmem:[#allocation5 + $0x28] sm:$0xff]
          %v1060 = vld [vmem:[#allocation5 + $0x30] sm:$0xff]
          %v1061 = vld [vmem:[#allocation5 + $0x38] sm:$0xff]
          %1063 = vset.pattern.permute.xlu0 0
          %1064 = vperm.xlu0 %1063, %v1046
          %v1065 = vpop.permute.xlu0 %1064
          %1068 = vset.pattern.permute.xlu0 0
          %1069 = vperm.xlu0 %1068, %v1047
          %v1070 = vpop.permute.xlu0 %1069
          %1073 = vset.pattern.permute.xlu0 0
          %1074 = vperm.xlu0 %1073, %v1048
          %v1075 = vpop.permute.xlu0 %1074
          %1078 = vset.pattern.permute.xlu0 0
          %1079 = vperm.xlu0 %1078, %v1049
          %v1080 = vpop.permute.xlu0 %1079
          %1083 = vset.pattern.permute.xlu0 0
          %1084 = vperm.xlu0 %1083, %v1050
          %v1085 = vpop.permute.xlu0 %1084
          %1088 = vset.pattern.permute.xlu0 0
          %1089 = vperm.xlu0 %1088, %v1051
          %v1090 = vpop.permute.xlu0 %1089
          %1093 = vset.pattern.permute.xlu0 0
          %1094 = vperm.xlu0 %1093, %v1052
          %v1095 = vpop.permute.xlu0 %1094
          %1098 = vset.pattern.permute.xlu0 0
          %1099 = vperm.xlu0 %1098, %v1053
          %v1100 = vpop.permute.xlu0 %1099
          %v1102 = vmul.f32 %v1054, %v1065
          %v1103 = vmul.f32 %v1055, %v1070
          %v1104 = vmul.f32 %v1056, %v1075
          %v1105 = vmul.f32 %v1057, %v1080
          %v1106 = vmul.f32 %v1058, %v1085
          %v1107 = vmul.f32 %v1059, %v1090
          %v1108 = vmul.f32 %v1060, %v1095
          %v1109 = vmul.f32 %v1061, %v1100
          %1110 = vst.msk [vmem:[%s404] sm:$0xff] %vm496, %v1102
          %1111 = vst.msk [vmem:[%s404 + $0x8] sm:$0xff] %vm496, %v1103
          %1112 = vst.msk [vmem:[%s404 + $0x10] sm:$0xff] %vm496, %v1104
          %1113 = vst.msk [vmem:[%s404 + $0x18] sm:$0xff] %vm496, %v1105
          %1114 = vst.msk [vmem:[%s404 + $0x20] sm:$0xff] %vm496, %v1106
          %1115 = vst.msk [vmem:[%s404 + $0x28] sm:$0xff] %vm496, %v1107
          %1116 = vst.msk [vmem:[%s404 + $0x30] sm:$0xff] %vm496, %v1108
          %1117 = vst.msk [vmem:[%s404 + $0x38] sm:$0xff] %vm496, %v1109
        $region60: #{tpu_custom_call.1} parent=35 // pred_fallthru
          _
        %s1118 = sand.u32 %s185, 1
        %s1119 = scalar_lea.sflag [#allocation8], %s1118
        %s1120 = sand.u32 %s185, 1
        %s1121 = smul.addr %s1120, 64
        %s1122 = scalar_lea.vmem [#allocation14], %s1121
        // Predicated region
        $region61: #{tpu_custom_call.1} parent=35 // pred_check
          %p1123 = pneg %p195
        $region62: #{tpu_custom_call.1} parent=35 // pred_check_branch
          %1125 = sbr.rel (%p1123) target = $region64
        $region63: #{tpu_custom_call.1} parent=35 // pred_region
          %s1126 = smul.u32 4, %s34
          %s1127 = smul.u32 2, %s35
          %1129 = vsyncadd %s1119, 0
          %s1130 = smul.addr %s1126, 2
          %s1131 = sadd.s32 %s1127, %s1130
          %s1132 = smul.addr %s33, 8
          %s1133 = sadd.s32 %s1131, %s1132
          %s1134 = smul.addr %s1133, 8
          %s1135 = scalar_lea.hbm %s4, %s1134
          %s1136 = sshll.u32 %s1122, 4
          %s1137 = int_to_ptr.vmem [resolvable:$true] %s1136
          %s1138 = sshll.u32 %s1135, 4
          %s1139 = int_to_ptr.hbm [resolvable:$true] %s1138
          %1144 = dma.vmem_to_hbm [thread:$0]  %s1137, 1024, %s1139, %s1119, 128, 128, 8
        $region64: #{tpu_custom_call.1} parent=35 // pred_fallthru
          _
      $region36: #{tpu_custom_call.1} parent=5 // pred_fallthru
        _
      %p1145 = scmp.le.s32.totalorder 2, %s22
      // Predicated region
      $region65: #{tpu_custom_call.1} parent=5 // pred_check
        %p1146 = pneg %p1145
      $region66: #{tpu_custom_call.1} parent=5 // pred_check_branch
        %1148 = sbr.rel (%p1146) target = $region68
      $region67: #{tpu_custom_call.1} parent=5 // pred_region
        %s1149 = ssub.s32 %s22, 2
        // Predicated region
        $region69: #{tpu_custom_call.1} parent=67 // pred_check
          %p1150 = pneg %p201
        $region70: #{tpu_custom_call.1} parent=67 // pred_check_branch
          %1152 = sbr.rel (%p1150) target = $region72
        $region71: #{tpu_custom_call.1} parent=67 // pred_region
          %s1153 = sand.u32 %s186, 1
          %s1154 = scalar_lea.sflag [#allocation8], %s1153
          %s1155 = sand.u32 %s186, 1
          %s1156 = smul.addr %s1155, 64
          %s1157 = scalar_lea.vmem [#allocation14], %s1156
          %1159 = dma.done %s1154, 1024
        $region72: #{tpu_custom_call.1} parent=67 // pred_fallthru
          _
      $region68: #{tpu_custom_call.1} parent=5 // pred_fallthru
        _
    $region6: #{tpu_custom_call.1} parent=1 // loop_footer
      %s26 = sadd.s32 1, %s22
    $region7: #{tpu_custom_call.1} parent=1 // loop_footer_branch
      %21 = sbr.rel target = $region3
    $region8: #{tpu_custom_call.1} parent=1 // loop_exit
      _
    %1160 = vsyncpa [#allocation7], 1
    %s1161 = scalar_lea.sflag [#allocation7], 1
    %1162 = vsyncpa %s1161, 1
    %1163 = vsyncpa [#allocation10], 1
    %s1164 = scalar_lea.sflag [#allocation10], 1
    %1165 = vsyncpa %s1164, 1
    %1166 = vsyncpa [#allocation13], 1
    %s1167 = scalar_lea.sflag [#allocation13], 1
    %1168 = vsyncpa %s1167, 1
    %1169 = vsyncpa [#allocation8], 1
    %s1170 = scalar_lea.sflag [#allocation8], 1
    %1171 = vsyncpa %s1170, 1

</llo_original>
